<compile_context>
chip_gen: v5e
topology: v5e:2x2
jax: 0.10.0
libtpu: 0.0.40
codegen_flags: <defaults>
</compile_context>

<pallas_src>
import functools

import jax
import jax.numpy as jnp
import numpy as np
from jax import lax
from jax.experimental import pallas as pl
from jax.experimental.pallas import tpu as pltpu

_EPS = 1e-5
_VMEM_LIMIT = 32 * 1024 * 1024        # worst fused stage (last_layer) ~14 MiB
_HIGHEST = jax.lax.Precision.HIGHEST

# (in_planes, planes, num_blocks, stride) per stage.  torch's layer4 stride [1]
# broadcasts to (1, 1); the module's unused self.layer5_1 branch is not built.
_LAYER_CFG = {
    "layer1": (32, 32, 3, (2, 2)),
    "layer2": (32, 64, 4, (2, 2)),
    "layer3": (64, 128, 6, (2, 2)),
    "layer4": (128, 256, 6, (1, 1)),
    "layer5": (256, 256, 3, (1, 1)),
    "last_layer": (512, 300, 3, (1, 1)),
}


# ----------------------------------------------------------------------------
# pltpu.roll direction probe (one-time, outside the hot path)
# ----------------------------------------------------------------------------
def _roll_probe_kernel(x_ref, o_ref):
    o_ref[...] = pltpu.roll(x_ref[...], 1, 0)


@functools.lru_cache(maxsize=None)
def _roll_matches_jnp():
    """pltpu.roll is documented as jnp.roll-equivalent; verify the direction
    once at setup so the 3x3 tap shifts can never silently flip sign."""
    x = np.arange(8 * 128, dtype=np.float32).reshape(8, 128)
    y = np.asarray(pl.pallas_call(
        _roll_probe_kernel,
        out_shape=jax.ShapeDtypeStruct((8, 128), jnp.float32),
    )(jnp.asarray(x)))
    if np.array_equal(y, np.roll(x, 1, axis=0)):
        return True
    if np.array_equal(y, np.roll(x, -1, axis=0)):
        return False
    raise AssertionError("pltpu.roll probe returned an unexpected permutation")


# ----------------------------------------------------------------------------
# Kernels
# ----------------------------------------------------------------------------
def _fused_stage_kernel(x_ref, w1f_ref, wd_ref, bd_ref, w1s_ref, b1_ref,
                        w2_ref, b2_ref, o_ref, h_ref, res_ref,
                        *, H, W, roll_like_jnp):
    """One whole residual stage.  Grid step i == AsterBlock i of the stage.

    Block 0 : conv1x1(+BN1)+ReLU on x_ref; residual = folded 1x1 projection
              (an identity matrix when the stage has no downsample).
    Block i>0: conv1x1(+BN1)+ReLU on the previous block's output, which lives
              in the revisited VMEM output block o_ref; residual = identity.
    Common  : 3x3 conv (stride 1, pad 1, +BN2) as 9 roll+mask MXU dots,
              + residual, ReLU -> o_ref.  HBM writeback happens only once,
              after the last grid step (constant output index map).
    """
    i = pl.program_id(0)
    M, P = o_ref.shape

    @pl.when(i == 0)
    def _first_block():
        x0 = x_ref[...]                                        # (M, Cin)
        h_ref[...] = jnp.maximum(
            jnp.dot(x0, w1f_ref[...], precision=_HIGHEST,
                    preferred_element_type=jnp.float32) + b1_ref[0], 0.0)
        res_ref[...] = jnp.dot(x0, wd_ref[...], precision=_HIGHEST,
                               preferred_element_type=jnp.float32) + bd_ref[...]

    @pl.when(i > 0)
    def _later_block():
        xp = o_ref[...]                                        # previous block out
        h_ref[...] = jnp.maximum(
            jnp.dot(xp, w1s_ref[0], precision=_HIGHEST,
                    preferred_element_type=jnp.float32) + b1_ref[0], 0.0)
        res_ref[...] = xp

    # 3x3 conv, pad 1: tap (dy, dx) of output row m reads row m + dy*W + dx of
    # the flattened (N*H*W, P) activation.  Out-of-image taps — which include
    # every cross-image wrap of the circular roll — are zeroed by the mask.
    h = h_ref[...]
    row = lax.broadcasted_iota(jnp.int32, (M, 1), 0)
    yy = (row // W) % H
    xx = row % W

    acc = jnp.broadcast_to(b2_ref[0], (M, P)).astype(jnp.float32)  # bias-init
    k = 0
    for dy in (-1, 0, 1):
        for dx in (-1, 0, 1):
            s = dy * W + dx
            if s == 0:
                patch = h
            else:
                shift = (-s) % M if roll_like_jnp else s % M
                patch = pltpu.roll(h, shift, 0)
                valid = ((yy + dy >= 0) & (yy + dy < H) &
                         (xx + dx >= 0) & (xx + dx < W))
                patch = jnp.where(valid, patch, 0.0)
            acc = acc + jnp.dot(patch, w2_ref[0, k], precision=_HIGHEST,
                                preferred_element_type=jnp.float32)
            k += 1

    o_ref[...] = jnp.maximum(acc + res_ref[...], 0.0)


def _aux_head_kernel(x_ref, w1_ref, b1_ref, w2_ref, b2_ref, w3_ref, b3_ref, o_ref):
    """GAP'd features -> linear1 -> linear2 -> linear3 -> sigmoid, fused."""
    h = jnp.dot(x_ref[...], w1_ref[...], precision=_HIGHEST,
                preferred_element_type=jnp.float32) + b1_ref[...]
    h = jnp.dot(h, w2_ref[...], precision=_HIGHEST,
                preferred_element_type=jnp.float32) + b2_ref[...]
    h = jnp.dot(h, w3_ref[...], precision=_HIGHEST,
                preferred_element_type=jnp.float32) + b3_ref[...]
    o_ref[...] = 1.0 / (1.0 + jnp.exp(-h))


# ----------------------------------------------------------------------------
# Wrappers
# ----------------------------------------------------------------------------
def _fused_stage(h_flat, hw, lp):
    """Run every AsterBlock of one stage as a single pallas_call.

    h_flat: (N*H*W, Cin) NHWC-flattened activations, already strided for this
            stage.  Returns (N*H*W, planes).
    """
    H, W = hw
    M, cin = h_flat.shape
    nb, _, P = lp["w1s"].shape

    kernel = functools.partial(_fused_stage_kernel, H=H, W=W,
                               roll_like_jnp=_roll_matches_jnp())
    return pl.pallas_call(
        kernel,
        out_shape=jax.ShapeDtypeStruct((M, P), jnp.float32),
        grid_spec=pltpu.PrefetchScalarGridSpec(
            num_scalar_prefetch=0,
            grid=(nb,),
            in_specs=[
                # Constant-index blocks: DMA'd once, resident for the stage.
                # (pl.Buffered(1) would save their second pipeline buffer; not
                # needed at <16 MiB/stage of total VMEM use.)
                pl.BlockSpec((M, cin), lambda i: (0, 0)),        # activations
                pl.BlockSpec((cin, P), lambda i: (0, 0)),        # conv1 W, block 0
                pl.BlockSpec((cin, P), lambda i: (0, 0)),        # residual proj W
                pl.BlockSpec((1, P), lambda i: (0, 0)),          # residual proj b
                # Per-block stacked folded weights, pipelined over the grid.
                pl.BlockSpec((1, P, P), lambda i: (i, 0, 0)),    # conv1 W, blocks>0
                pl.BlockSpec((1, 1, P), lambda i: (i, 0, 0)),    # conv1 b
                pl.BlockSpec((1, 9, P, P), lambda i: (i, 0, 0, 0)),  # conv2 W (9 taps)
                pl.BlockSpec((1, 1, P), lambda i: (i, 0, 0)),    # conv2 b
            ],
            out_specs=pl.BlockSpec((M, P), lambda i: (0, 0)),    # revisited/resident
            scratch_shapes=[pltpu.VMEM((M, P), jnp.float32),     # conv1 output
                            pltpu.VMEM((M, P), jnp.float32)],    # residual
        ),
        compiler_params=pltpu.CompilerParams(
            dimension_semantics=("arbitrary",),   # blocks are sequentially dependent
            vmem_limit_bytes=_VMEM_LIMIT,
        ),
    )(h_flat, lp["w1f"], lp["wd"], lp["bd"],
      lp["w1s"], lp["b1s"], lp["w2s"], lp["b2s"])


def _subsample(h_flat, hw, n_img, stride):
    """Stride the flattened NHWC activation once in the wrapper (it feeds both
    conv1 and the projection of the stage's first block)."""
    sh, sw = stride
    if (sh, sw) == (1, 1):
        return h_flat, hw
    H, W = hw
    c = h_flat.shape[-1]
    h4 = h_flat.reshape(n_img, H, W, c)[:, ::sh, ::sw, :]
    ho, wo = h4.shape[1], h4.shape[2]
    return h4.reshape(n_img * ho * wo, c), (ho, wo)


def _fold_bn(w_oihw, bn):
    """Fold an inference BatchNorm into the preceding conv: returns (w', b')."""
    s = bn["g"] / jnp.sqrt(bn["v"] + _EPS)
    return w_oihw * s[:, None, None, None], bn["b"] - bn["m"] * s


def prepare_params(params):
    """One-time weight preparation: BN folding, transposes, per-stage stacking.
    Run once outside the hot path; resnet_aster_forward takes its output."""
    prep = {}
    w0, b0 = _fold_bn(params["layer0"]["w"], params["layer0"]["bn"])
    prep["layer0"] = {"w": w0, "b": b0}

    for name, (_cin, planes, _nb, _stride) in _LAYER_CFG.items():
        blocks = params[name]
        p = planes

        if "wd" in blocks[0]:
            wd, bd = _fold_bn(blocks[0]["wd"], blocks[0]["bnd"])
            wdm = jnp.transpose(wd[:, :, 0, 0], (1, 0))
            bdv = bd.reshape(1, p)
        else:                      # identity-residual stage (layer5): cin == p
            wdm = jnp.eye(p, dtype=jnp.float32)
            bdv = jnp.zeros((1, p), jnp.float32)

        w1f = None
        w1s, b1s, w2s, b2s = [], [], [], []
        for bi, bp in enumerate(blocks):
            w1, b1 = _fold_bn(bp["w1"], bp["bn1"])
            w2, b2 = _fold_bn(bp["w2"], bp["bn2"])
            w1m = jnp.transpose(w1[:, :, 0, 0], (1, 0))
            if bi == 0:
                w1f = w1m                                         # (cin, p)
                w1s.append(jnp.zeros((p, p), jnp.float32))        # unused slot
            else:
                w1s.append(w1m)
            b1s.append(b1.reshape(1, p))
            # (O,I,3,3) -> (ky*3+kx, I, O): tap-major, matmul-ready.
            w2s.append(jnp.transpose(w2, (2, 3, 1, 0)).reshape(9, p, p))
            b2s.append(b2.reshape(1, p))

        prep[name] = {"w1f": w1f, "wd": wdm, "bd": bdv,
                      "w1s": jnp.stack(w1s), "b1s": jnp.stack(b1s),
                      "w2s": jnp.stack(w2s), "b2s": jnp.stack(b2s)}

    prep["aux"] = {}
    for i, name in enumerate(("linear1", "linear2", "linear3"), 1):
        prep["aux"][f"w{i}"] = jnp.transpose(params[name]["w"], (1, 0))
        prep["aux"][f"b{i}"] = params[name]["b"].reshape(1, -1)
    return prep


def resnet_aster_forward(x_nchw, prep):
    """Inference forward.  Returns (out [N,300,H/8,W/8], aux [N])."""
    n = x_nchw.shape[0]

    # layer0 (3x3 conv + folded BN + ReLU).  Its output is consumed only through
    # layer1's stride-(2,2) convs, so run the conv directly at stride 2:
    # identical values, 4x fewer positions, no wrapper-side im2col.
    h0 = lax.conv_general_dilated(
        x_nchw, prep["layer0"]["w"], (2, 2), ((1, 1), (1, 1)),
        dimension_numbers=("NCHW", "OIHW", "NCHW"), precision=_HIGHEST)
    h0 = jnp.maximum(h0 + prep["layer0"]["b"][None, :, None, None], 0.0)
    h0 = jnp.transpose(h0, (0, 2, 3, 1))                       # NHWC
    hw = (h0.shape[1], h0.shape[2])
    h = h0.reshape(n * hw[0] * hw[1], h0.shape[3])             # (N*H*W, 32)

    h = _fused_stage(h, hw, prep["layer1"])                    # stride pre-applied
    x5 = None
    for name in ("layer2", "layer3", "layer4", "layer5"):
        h, hw = _subsample(h, hw, n, _LAYER_CFG[name][3])
        h = _fused_stage(h, hw, prep[name])
        if name == "layer5":
            x5 = h
    # torch calls self.layer5 twice on the same input (eval-mode BN): identical.
    x5_1 = x5
    out_flat = _fused_stage(jnp.concatenate([x5, x5_1], axis=-1), hw,
                            prep["last_layer"])
    hf, wf = hw
    out = jnp.transpose(out_flat.reshape(n, hf, wf, -1), (0, 3, 1, 2))  # NCHW

    gap = jnp.mean(x5_1.reshape(n, hf * wf, -1), axis=1)       # AdaptiveAvgPool2d(1)
    aux = pl.pallas_call(
        _aux_head_kernel,
        out_shape=jax.ShapeDtypeStruct((n, 1), jnp.float32),
        compiler_params=pltpu.CompilerParams(vmem_limit_bytes=_VMEM_LIMIT),
    )(gap, prep["aux"]["w1"], prep["aux"]["b1"], prep["aux"]["w2"],
      prep["aux"]["b2"], prep["aux"]["w3"], prep["aux"]["b3"])[:, 0]
    return out, aux


# ----------------------------------------------------------------------------
# Parameters and pure-JAX reference (same inference semantics) for verification.
# ----------------------------------------------------------------------------
def _init_params(key, in_channels=1):
    keys = iter(jax.random.split(key, 400))

    def nk():
        return next(keys)

    def conv_w(cout, cin, k):
        std = 0.5 * float(np.sqrt(2.0 / (cin * k * k)))
        return jax.random.normal(nk(), (cout, cin, k, k), jnp.float32) * std

    def bn_p(c):
        return {"g": 1.0 + 0.1 * jax.random.normal(nk(), (c,), jnp.float32),
                "b": 0.1 * jax.random.normal(nk(), (c,), jnp.float32),
                "m": 0.1 * jax.random.normal(nk(), (c,), jnp.float32),
                "v": jax.random.uniform(nk(), (c,), jnp.float32, 0.5, 1.5)}

    params = {"layer0": {"w": conv_w(32, in_channels, 3), "bn": bn_p(32)}}
    for name, (cin, cout, blocks, stride) in _LAYER_CFG.items():
        blist = []
        for bi in range(blocks):
            b_in = cin if bi == 0 else cout
            bp = {"w1": conv_w(cout, b_in, 1), "bn1": bn_p(cout),
                  "w2": conv_w(cout, cout, 3), "bn2": bn_p(cout)}
            if bi == 0 and (stride != (1, 1) or cin != cout):
                bp["wd"] = conv_w(cout, b_in, 1)
                bp["bnd"] = bn_p(cout)
            blist.append(bp)
        params[name] = blist

    def lin(cout, cin):
        std = 0.5 * float(np.sqrt(1.0 / cin))
        return {"w": jax.random.normal(nk(), (cout, cin), jnp.float32) * std,
                "b": 0.1 * jax.random.normal(nk(), (cout,), jnp.float32)}

    params["linear1"] = lin(512, 256)
    params["linear2"] = lin(1024, 512)
    params["linear3"] = lin(1, 1024)
    return params


def _reference_forward(x_nchw, params):
    hp = jax.lax.Precision.HIGHEST

    def bn(x, p):
        s = p["g"] / jnp.sqrt(p["v"] + _EPS)
        return x * s[None, :, None, None] + (p["b"] - p["m"] * s)[None, :, None, None]

    def conv(x, w, stride=(1, 1), padding="VALID"):
        return jax.lax.conv_general_dilated(
            x, w, stride, padding,
            dimension_numbers=("NCHW", "OIHW", "NCHW"), precision=hp)

    def block(x, bp, stride):
        out = jax.nn.relu(bn(conv(x, bp["w1"], stride), bp["bn1"]))
        out = bn(conv(out, bp["w2"], (1, 1), ((1, 1), (1, 1))), bp["bn2"])
        res = bn(conv(x, bp["wd"], stride), bp["bnd"]) if "wd" in bp else x
        return jax.nn.relu(out + res)

    def layer(x, name):
        stride = _LAYER_CFG[name][3]
        for bi, bp in enumerate(params[name]):
            x = block(x, bp, stride if bi == 0 else (1, 1))
        return x

    h = jax.nn.relu(bn(conv(x_nchw, params["layer0"]["w"], (1, 1), ((1, 1), (1, 1))),
                       params["layer0"]["bn"]))
    h = layer(h, "layer1")
    h = layer(h, "layer2")
    h = layer(h, "layer3")
    x4 = layer(h, "layer4")
    x5 = layer(x4, "layer5")
    x5_1 = x5
    out = layer(jnp.concatenate([x5, x5_1], axis=1), "last_layer")

    gap = jnp.mean(x5_1, axis=(2, 3))
    l1 = jnp.dot(gap, params["linear1"]["w"].T, precision=hp) + params["linear1"]["b"]
    l2 = jnp.dot(l1, params["linear2"]["w"].T, precision=hp) + params["linear2"]["b"]
    l3 = jnp.dot(l2, params["linear3"]["w"].T, precision=hp) + params["linear3"]["b"]
    aux = jax.nn.sigmoid(l3[:, 0])
    return out, aux


if __name__ == "__main__":
    n, c, hh, ww = 2, 1, 32, 64            # batch=2, 1-channel 32x64 image
    key = jax.random.PRNGKey(0)
    kx, kp = jax.random.split(key)
    x = jax.random.normal(kx, (n, c, hh, ww), jnp.float32)
    params = _init_params(kp, in_channels=c)

    _roll_matches_jnp()                    # one-time probe, outside the jit
    prep = jax.jit(prepare_params)(params) # one-time BN fold / stack / transpose
    fwd = jax.jit(resnet_aster_forward)

    out, aux = fwd(x, prep)
    out = jax.block_until_ready(out)
    aux = jax.block_until_ready(aux)

    assert out.shape == (n, 300, hh // 8, ww // 8), out.shape
    assert aux.shape == (n,), aux.shape

    ref_out, ref_aux = _reference_forward(x, params)
    ref_out = jax.block_until_ready(ref_out)
    ref_aux = jax.block_until_ready(ref_aux)

    np.testing.assert_allclose(np.asarray(out), np.asarray(ref_out),
                               rtol=3e-3, atol=3e-3)
    np.testing.assert_allclose(np.asarray(aux), np.asarray(ref_aux),
                               rtol=3e-3, atol=3e-3)
    print("KERNEL_OK")
</pallas_src>

<mosaic_0001>
module attributes {stable_mosaic.version = 11 : i64} {
  func.func @_roll_probe_kernel(%arg0: memref<8x128xf32, #tpu.memory_space<vmem>>, %arg1: memref<8x128xf32, #tpu.memory_space<vmem>>) attributes {dimension_semantics = [], scalar_prefetch = 0 : i64, scratch_operands = 0 : i64, tpu.core_type = #tpu.core_type<tc>} {
    %c0 = arith.constant 0 : index
    %c0_0 = arith.constant 0 : index
    %0 = vector.load %arg0[%c0, %c0_0] : memref<8x128xf32, #tpu.memory_space<vmem>>, vector<8x128xf32>
    %c1_i32 = arith.constant 1 : i32
    %1 = tpu.dynamic_rotate %0 by %c1_i32 dim 0 : vector<8x128xf32>, i32 -> vector<8x128xf32>
    %c0_1 = arith.constant 0 : index
    %c0_2 = arith.constant 0 : index
    %2 = vector.load %arg1[%c0_1, %c0_2] : memref<8x128xf32, #tpu.memory_space<vmem>>, vector<8x128xf32>
    tpu.vector_store %arg1[%c0_1, %c0_2], %1 {strides = array<i32>} : memref<8x128xf32, #tpu.memory_space<vmem>>, vector<8x128xf32>,
    return
  }
}

</mosaic_0001>

<llo_original>
// kernel: tpu_custom_call.1
$region0: #{tpu_custom_call.1}
  #allocation0 [shape = 'u32[]', space=smem, size = 0x4, offset = 0x4, fixed_abs, tag = 'smem constant byte address 0x4 - core index']
  #allocation1 [shape = 'u32[72,128]{1,0:T(1,128)}', space=vmem, size = 0x9000, scoped, tag = 'internal scratch']
  %s0 = inlined_call_operand.hbm [shape: f32[8,128], index: 0, kind: input, shape index: {}]
  %s1 = inlined_call_operand.hbm [shape: f32[8,128], index: 1, kind: output, shape index: {}]
  %s2 = sld [smem:[#allocation0]]
  $region18: #{tpu_custom_call.1} parent=0
    _
  %s4 = ssub.s32 1, %s2
  %s5 = scalar_select 0, %s4, %s2
  $region1: #{tpu_custom_call.1} parent=0
    #allocation2 [shape = 'u8[4096]{0}', space=vmem, size = 0x1000, scoped, tag = 'input window, operand 0, single buffered']
    #allocation3 [shape = 's32[1]{0}', space=sflag, size = 0x4, scoped, tag = 'scoped memory for tpu_custom_call.1']
    #allocation4 [shape = 's32[1]{0}', space=sflag, size = 0x4, scoped, tag = 'scoped memory for tpu_custom_call.1']
    #allocation5 [shape = 'u8[4096]{0}', space=vmem, size = 0x1000, scoped, tag = 'output window, operand 0, single buffered']
    %6 = vsyncpa [#allocation3], 0
    %7 = vsyncpa [#allocation4], 0
    // Predicated region
    $region2: #{tpu_custom_call.1} parent=1 // pred_check
      _
    $region3: #{tpu_custom_call.1} parent=1 // pred_check_branch
      %9 = sbr.rel (0) target = $region5
    $region4: #{tpu_custom_call.1} parent=1 // pred_region
      %11 = vsyncadd [#allocation3], 0
      %s13 = sshll.u32 %s0, 4
      %s14 = int_to_ptr.hbm [resolvable:$true] %s13
      %s15 = sshll.u32 [#allocation2], 4
      %s16 = int_to_ptr.vmem [resolvable:$true] %s15
      %18 = dma.hbm_to_vmem [thread:$0]  %s14, 128, %s16, [#allocation3]
    $region5: #{tpu_custom_call.1} parent=1 // pred_fallthru
      _
    // Predicated region
    $region6: #{tpu_custom_call.1} parent=1 // pred_check
      _
    $region7: #{tpu_custom_call.1} parent=1 // pred_check_branch
      %20 = sbr.rel (0) target = $region9
    $region8: #{tpu_custom_call.1} parent=1 // pred_region
      %22 = dma.done [#allocation3], 128
    $region9: #{tpu_custom_call.1} parent=1 // pred_fallthru
      _
    %v23 = vld [vmem:[#allocation2] sm:$0xff]
    %v24 = vrot.slane %v23, 7
    %25 = vst [vmem:[#allocation5] sm:$0xff] %v24
    // Predicated region
    $region10: #{tpu_custom_call.1} parent=1 // pred_check
      _
    $region11: #{tpu_custom_call.1} parent=1 // pred_check_branch
      %27 = sbr.rel (0) target = $region13
    $region12: #{tpu_custom_call.1} parent=1 // pred_region
      %29 = vsyncadd [#allocation4], 0
      %s31 = sshll.u32 [#allocation5], 4
      %s32 = int_to_ptr.vmem [resolvable:$true] %s31
      %s33 = sshll.u32 %s1, 4
      %s34 = int_to_ptr.hbm [resolvable:$true] %s33
      %36 = dma.vmem_to_hbm [thread:$0]  %s32, 128, %s34, [#allocation4]
    $region13: #{tpu_custom_call.1} parent=1 // pred_fallthru
      _
    // Predicated region
    $region14: #{tpu_custom_call.1} parent=1 // pred_check
      _
    $region15: #{tpu_custom_call.1} parent=1 // pred_check_branch
      %38 = sbr.rel (0) target = $region17
    $region16: #{tpu_custom_call.1} parent=1 // pred_region
      %40 = dma.done [#allocation4], 128
    $region17: #{tpu_custom_call.1} parent=1 // pred_fallthru
      _
    %41 = vsyncpa [#allocation3], 1
    %42 = vsyncpa [#allocation4], 1

</llo_original>
